<compile_context>
chip_gen: v7x
topology: tpu7x:2x2x1
jax: 0.10.0
libtpu: 0.0.40
codegen_flags: <defaults>
</compile_context>

<pallas_src>
import functools

import jax
import jax.numpy as jnp
from jax import lax
from jax.experimental import pallas as pl
from jax.experimental.pallas import tpu as pltpu

LANE_COLS_CHOICES = (1024, 512, 256, 128)   # lane-dense widths (multiples of 128)
TILE_ROWS = 512                             # (512, 1024) f32 tile = 2 MiB
FUSED_MAX_BYTES = 4 * 1024 * 1024           # whole-slab single-kernel fast path


def _round_up(a: int, b: int) -> int:
    return ((a + b - 1) // b) * b


def _sublane_multiple(dtype) -> int:
    # 8 rows for 4-byte dtypes, 16 for 2-byte (bf16/f16), 32 for 1-byte.
    return max(8, 32 // jnp.dtype(dtype).itemsize)


# ------------------------------------------------------------------ kernels

def _fused_kernel(x_ref, o_ref, *, inv_n: float):
    """Whole slab resident in VMEM: load once, mean, subtract, store."""
    x = x_ref[...]
    xf = x.astype(jnp.float32)
    mean = jnp.sum(xf) * jnp.float32(inv_n)   # 1/N folded at trace time
    if jnp.issubdtype(o_ref.dtype, jnp.floating):
        o_ref[...] = x - mean.astype(x.dtype)
    else:
        # TODO(synk): integer inputs are truncated back to the input dtype;
        # PyTorch's CenteredLayer would promote to float.
        o_ref[...] = (xf - mean).astype(o_ref.dtype)


def _partial_sum_kernel(x_ref, psum_ref, *, rows_total, tile_rows, mask_tail):
    """Pass 1: per-tile column partial sums.  Each grid step writes its own
    output block, so the grid axis is 'parallel' (both TCs on v7x)."""
    x = x_ref[...].astype(jnp.float32)
    if mask_tail:
        # The last tile may extend past the array; zero the out-of-range rows
        # (out-of-bounds reads are unspecified, so mask explicitly).
        row = lax.broadcasted_iota(jnp.int32, x.shape, 0) + pl.program_id(0) * tile_rows
        x = jnp.where(row < rows_total, x, jnp.float32(0.0))
    psum_ref[...] = jnp.sum(x, axis=0)[None, None, :]


def _subtract_kernel(mean_ref, x_ref, o_ref):
    """Pass 2: o = x - mean (scalar broadcast) on a lane-dense tile."""
    x = x_ref[...]
    m = mean_ref[0, 0]
    if jnp.issubdtype(o_ref.dtype, jnp.floating):
        # Subtract directly in the input dtype (native bf16 VPU on v6e/v7x).
        o_ref[...] = x - m.astype(x.dtype)
    else:
        o_ref[...] = (x.astype(jnp.float32) - m).astype(o_ref.dtype)


# ------------------------------------------------------------------ wrapper

def _centered_layer_impl(x, tile_rows: int = TILE_ROWS):
    orig_shape = x.shape
    n = x.size
    if n == 0:
        return x
    dtype = x.dtype
    itemsize = jnp.dtype(dtype).itemsize

    flat = x.reshape(-1)

    # Lane-dense slab: widest lane count dividing N -> no pad copy needed.
    cols = next((c for c in LANE_COLS_CHOICES if n % c == 0), None)
    padded = cols is None
    if padded:
        # Rare ragged case (N % 128 != 0): zero-pad (zeros don't change the sum).
        cols = 128 if n < 8 * 1024 else 1024
        rows = -(-n // cols)
        flat = jnp.pad(flat, (0, rows * cols - n))
    else:
        rows = n // cols
    x2 = flat.reshape(rows, cols)
    inv_n = 1.0 / n

    if rows * cols * itemsize <= FUSED_MAX_BYTES:
        # ---- fast path: one kernel, whole slab resident in VMEM (2N traffic).
        out2 = pl.pallas_call(
            functools.partial(_fused_kernel, inv_n=inv_n),
            out_shape=jax.ShapeDtypeStruct((rows, cols), dtype),
        )(x2)
    else:
        # ---- pass 1: tiled partial sums (megacore-parallel), XLA tree-reduce.
        tr = _round_up(min(tile_rows, rows), _sublane_multiple(dtype))
        grid_r = pl.cdiv(rows, tr)
        mask_tail = (rows % tr) != 0
        psums = pl.pallas_call(
            functools.partial(_partial_sum_kernel, rows_total=rows,
                              tile_rows=tr, mask_tail=mask_tail),
            out_shape=jax.ShapeDtypeStruct((grid_r, 1, cols), jnp.float32),
            grid=(grid_r,),
            in_specs=[pl.BlockSpec((tr, cols), lambda i: (i, 0))],
            out_specs=pl.BlockSpec((1, 1, cols), lambda i: (i, 0, 0)),
            compiler_params=pltpu.CompilerParams(
                dimension_semantics=("parallel",)),
        )(x2)
        mean = (jnp.sum(psums, dtype=jnp.float32)
                * jnp.float32(inv_n)).reshape(1, 1)

        # ---- pass 2: tiled broadcast subtract (both v7x TCs via "parallel").
        out2 = pl.pallas_call(
            _subtract_kernel,
            out_shape=jax.ShapeDtypeStruct((rows, cols), dtype),
            grid=(grid_r,),
            in_specs=[
                pl.BlockSpec(memory_space=pltpu.MemorySpace.SMEM),  # (1,1) mean
                pl.BlockSpec((tr, cols), lambda i: (i, 0)),
            ],
            out_specs=pl.BlockSpec((tr, cols), lambda i: (i, 0)),
            compiler_params=pltpu.CompilerParams(
                dimension_semantics=("parallel",)),
            # Alias only when x2 is an internal padded temp: free footprint
            # savings, never touches the caller's buffer.
            input_output_aliases=({1: 0} if padded else {}),
        )(mean, x2)

    if padded:
        return out2.reshape(-1)[:n].reshape(orig_shape)
    return out2.reshape(orig_shape)


centered_layer = jax.jit(_centered_layer_impl, static_argnames=("tile_rows",))


if __name__ == "__main__":
    key = jax.random.PRNGKey(0)

    def check(xx, atol=1e-5):
        out = jax.block_until_ready(centered_layer(xx))
        ref = xx - jnp.mean(xx)
        assert out.shape == xx.shape and out.dtype == xx.dtype
        assert jnp.allclose(out, ref, atol=atol, rtol=1e-5), "mismatch vs reference"
        assert abs(float(jnp.mean(out))) < 1e-3, "output not centered"

    k0, k1, k2 = jax.random.split(key, 3)
    # Primary demo: small 4-D tensor (the module accepts any tensor shape).
    check(jax.random.normal(k0, (2, 4, 16, 16), dtype=jnp.float32))   # fused fast path
    # Coverage: tiled 2-pass path with a ragged last row-tile (masked in-kernel).
    check(jax.random.normal(k1, (2304, 1024), dtype=jnp.float32))
    # Coverage: ragged size (N % 128 != 0) -> zero-pad fallback.
    check(jax.random.normal(k2, (3, 5, 7), dtype=jnp.float32))

    print("KERNEL_OK")
</pallas_src>

<mosaic_0001>
module attributes {stable_mosaic.version = 11 : i64} {
  func.func @_fused_kernel(%arg0: memref<2x1024xf32, #tpu.memory_space<vmem>>, %arg1: memref<2x1024xf32, #tpu.memory_space<vmem>>) attributes {dimension_semantics = [], scalar_prefetch = 0 : i64, scratch_operands = 0 : i64, tpu.core_type = #tpu.core_type<tc>} {
    %c0 = arith.constant 0 : index
    %c0_0 = arith.constant 0 : index
    %0 = vector.load %arg0[%c0, %c0_0] : memref<2x1024xf32, #tpu.memory_space<vmem>>, vector<2x1024xf32>
    %1 = vector.shape_cast %0 : vector<2x1024xf32> to vector<1x2x1024xf32>
    %cst = arith.constant dense<0.000000e+00> : vector<1xf32>
    %2 = vector.multi_reduction <add>, %1, %cst [1, 2] : vector<1x2x1024xf32> to vector<1xf32>
    %3 = vector.shape_cast %2 : vector<1xf32> to vector<1x1x1xf32>
    %4 = vector.extract %3[0, 0, 0] : f32 from vector<1x1x1xf32>
    %cst_1 = arith.constant 4.8828125E-4 : f32
    %5 = arith.mulf %4, %cst_1 : f32
    %6 = vector.broadcast %5 : f32 to vector<2x1024xf32>
    %7 = arith.subf %0, %6 : vector<2x1024xf32>
    %c0_2 = arith.constant 0 : index
    %c0_3 = arith.constant 0 : index
    %8 = vector.load %arg1[%c0_2, %c0_3] : memref<2x1024xf32, #tpu.memory_space<vmem>>, vector<2x1024xf32>
    tpu.vector_store %arg1[%c0_2, %c0_3], %7 {strides = array<i32>} : memref<2x1024xf32, #tpu.memory_space<vmem>>, vector<2x1024xf32>,
    return
  }
}

</mosaic_0001>

<llo_original>
// kernel: _centered_layer_impl.1
$region0: #{_centered_layer_impl.1}
  #allocation0 [shape = 'u32[]', space=smem, size = 0x4, offset = 0x4, fixed_abs, tag = 'smem constant byte address 0x4 - core index']
  #allocation1 [shape = 'u32[144,128]{1,0:T(1,128)}', space=vmem, size = 0x12000, scoped, tag = 'internal scratch']
  %s0 = inlined_call_operand.vmem [shape: f32[2,1024], index: 0, kind: input, shape index: {}]
  %s1 = inlined_call_operand.vmem [shape: f32[2,1024], index: 1, kind: output, shape index: {}]
  %s2 = sld [smem:[#allocation0]]
  $region14: #{_centered_layer_impl.1} parent=0
    _
  %s4 = ssub.s32 1, %s2
  %s5 = scalar_select 0, %s4, %s2
  // Predicated region
  $region2: #{_centered_layer_impl.1} parent=0 // pred_check
    _
  $region3: #{_centered_layer_impl.1} parent=0 // pred_check_branch
    %7 = sbr.rel (0) target = $region5
  $region4: #{_centered_layer_impl.1} parent=0 // pred_region
    _
  $region5: #{_centered_layer_impl.1} parent=0 // pred_fallthru
    _
  %v8 = vld [vmem:[%s0] sm:$0xff]
  %v9 = vld [vmem:[%s0 + $0x8] sm:$0xff]
  %v12 = vcombine.high %v8, %v8
  %v14 = vunpack.c.l.s4 1983009808
  %v15 = vunpack.c.0.s8 %v14
  %v16 = vlaneseq
  %v17 = vshrl.u32 %v16, 7
  %v18 = vsub.s32 %v15, %v17
  %v19 = vrot.slane %v8, %v18
  %v21 = vunpack.c.l.s4 1983009808
  %v22 = vunpack.c.0.s8 %v21
  %v23 = vlaneseq
  %v24 = vshrl.u32 %v23, 7
  %v25 = vsub.s32 %v22, %v24
  %v26 = vrot.slane %v12, %v25
  %v27 = vcombine.high %v19, %v19
  %v28 = vcombine.high %v26, %v26
  %v29 = vcombine.high %v9, %v9
  %v31 = vunpack.c.l.s4 1983009808
  %v32 = vunpack.c.0.s8 %v31
  %v33 = vlaneseq
  %v34 = vshrl.u32 %v33, 7
  %v35 = vsub.s32 %v32, %v34
  %v36 = vrot.slane %v9, %v35
  %v38 = vunpack.c.l.s4 1983009808
  %v39 = vunpack.c.0.s8 %v38
  %v40 = vlaneseq
  %v41 = vshrl.u32 %v40, 7
  %v42 = vsub.s32 %v39, %v41
  %v43 = vrot.slane %v29, %v42
  %v44 = vcombine.high %v36, %v36
  %v45 = vcombine.high %v43, %v43
  %vm54 = vcmask 1041408
  %v55 = vsel %vm54, %v19, 0.0
  %v56 = vsel %vm54, %v27, 0.0
  %v57 = vadd.f32 %v55, %v56
  %v58 = vsel %vm54, %v26, 0.0
  %v59 = vadd.f32 %v57, %v58
  %v60 = vsel %vm54, %v28, 0.0
  %v61 = vadd.f32 %v59, %v60
  %v62 = vsel %vm54, %v36, 0.0
  %v63 = vadd.f32 %v61, %v62
  %v64 = vsel %vm54, %v44, 0.0
  %v65 = vadd.f32 %v63, %v64
  %v66 = vsel %vm54, %v43, 0.0
  %v67 = vadd.f32 %v65, %v66
  %v68 = vsel %vm54, %v45, 0.0
  %v69 = vadd.f32 %v67, %v68
  %70 = vadd.xlane.f32.xlu0 %v69
  %v71 = vpop.xlane.xlu0 %70
  %v72 = vrot.slane %v71, 4
  %v73 = vadd.f32 %v71, %v72
  %v74 = vrot.slane %v73, 2
  %v75 = vadd.f32 %v73, %v74
  %v76 = vrot.slane %v75, 1
  %v77 = vadd.f32 %v75, %v76
  %s78 = vtos %v77
  %s79 = smul.f32 %s78, 0.00048828125
  %v80 = vstv %s79
  %v81 = vsub.f32 %v8, %v80
  %v82 = vsub.f32 %v9, %v80
  %83 = vst [vmem:[%s1] sm:$0xff] %v81
  %84 = vst [vmem:[%s1 + $0x8] sm:$0xff] %v82
  // Predicated region
  $region6: #{_centered_layer_impl.1} parent=0 // pred_check
    _
  $region7: #{_centered_layer_impl.1} parent=0 // pred_check_branch
    %86 = sbr.rel (0) target = $region9
  $region8: #{_centered_layer_impl.1} parent=0 // pred_region
    _
  $region9: #{_centered_layer_impl.1} parent=0 // pred_fallthru
    _
  // Predicated region
  $region10: #{_centered_layer_impl.1} parent=0 // pred_check
    _
  $region11: #{_centered_layer_impl.1} parent=0 // pred_check_branch
    %88 = sbr.rel (0) target = $region13
  $region12: #{_centered_layer_impl.1} parent=0 // pred_region
    _
  $region13: #{_centered_layer_impl.1} parent=0 // pred_fallthru
    _

</llo_original>
